<compile_context>
chip_gen: v5e
topology: v5e:2x2
jax: 0.10.0
libtpu: 0.0.40
codegen_flags: <defaults>
</compile_context>

<pallas_src>
import functools

import jax
import jax.numpy as jnp
from jax.experimental import pallas as pl
from jax.experimental.pallas import tpu as pltpu


def _reduce_attention_kernel(x_ref, wr_ref, br_ref, wa1_ref, ba1_ref,
                             wa2_ref, ba2_ref, wfc_ref, bfc_ref, o_ref,
                             *, s_valid):
    # x_ref:   (TB, S_pad, C_in)  bf16
    # wr_ref:  (C_in, C_r) bf16   br_ref:  (1, C_r) f32
    # wa1_ref: (C_r, H)    bf16   ba1_ref: (1, H)   f32
    # wa2_ref: (1, H)      bf16   ba2_ref: (1, 1)   f32
    # wfc_ref: (C_r, C_out) bf16  bfc_ref: (1, C_out) f32
    # o_ref:   (TB, C_out)
    tb, s_pad, c_in = x_ref.shape
    c_r = wr_ref.shape[1]

    # Flatten batch*instances into MXU rows; s_pad % 8 == 0 so this reshape
    # does not cross (8,128) tile boundaries (no relayout copy).
    x = x_ref[...].reshape(tb * s_pad, c_in)

    # reduce: Linear(C_in -> C_r). bf16 operands, f32 accumulation on the MXU.
    z = jnp.dot(x, wr_ref[...], preferred_element_type=jnp.float32)
    z = z + br_ref[...]                                   # (rows, C_r) f32

    # attention MLP: Linear(C_r -> H) -> tanh -> Linear(H -> 1)
    h = jnp.dot(z.astype(wa1_ref.dtype), wa1_ref[...],
                preferred_element_type=jnp.float32) + ba1_ref[...]
    h = jnp.tanh(h)                                       # f32 (v5e-safe, EUP)
    h3 = h.reshape(tb, s_pad, -1)                         # (TB, S_pad, H)
    # N=1 attention head: VPU multiply + XLU lane-reduce keeps the MXU free.
    # TODO(synk): if a bundle dump shows VALU binding, switch this to an MXU
    # dot with wa2 shaped (H, 1).
    logits = jnp.sum(h3 * wa2_ref[...], axis=-1) + ba2_ref[...]   # (TB, S_pad)

    if s_valid != s_pad:
        # Padded instances must not receive attention weight.
        col = jax.lax.broadcasted_iota(jnp.int32, logits.shape, 1)
        logits = jnp.where(col < s_valid, logits, -1e30)

    # softmax over the instance axis; the divide runs on the EUP.
    m = jnp.max(logits, axis=-1, keepdims=True)
    e = jnp.exp(logits - m)
    attn = e * pl.reciprocal(jnp.sum(e, axis=-1, keepdims=True), approx=True)

    # attention-weighted sum of the reduced features.
    z3 = z.reshape(tb, s_pad, c_r)                        # layout no-op
    feat = jnp.sum(z3 * attn[:, :, None], axis=1)         # (TB, C_r) f32

    # final fc: Linear(C_r -> C_out)
    out = jnp.dot(feat.astype(wfc_ref.dtype), wfc_ref[...],
                  preferred_element_type=jnp.float32) + bfc_ref[...]
    o_ref[...] = out.astype(o_ref.dtype)


def _tile_plan(batch, seq_pad, target_rows):
    """Pick a batch tile that is either the full batch or a multiple of 8.

    Returns (tb, padded_batch); padded_batch is a multiple of tb so every
    grid step sees a full, sublane-aligned block.
    """
    tb = max(1, target_rows // max(seq_pad, 1))
    if tb >= batch:
        return batch, batch              # full-extent block is always legal
    tb = max(8, (tb // 8) * 8)           # keep the output block 8-divisible
    if tb >= batch:
        return batch, batch
    b_pad = ((batch + tb - 1) // tb) * tb
    return tb, b_pad


def reduce_attention(x, w_reduce, b_reduce, w_att1, b_att1, w_att2, b_att2,
                     w_fc, b_fc, *, target_rows=1024):
    """ReduceAttention forward (default return_features=False path).

    x:        (B, S, C_in)
    w_reduce: (C_r, C_in)    b_reduce: (C_r,)
    w_att1:   (H, C_r)       b_att1:   (H,)
    w_att2:   (1, H)         b_att2:   (1,)
    w_fc:     (C_out, C_r)   b_fc:     (C_out,)
    returns:  (B, C_out)
    """
    B, S, C_in = x.shape
    C_r = w_reduce.shape[0]
    H = w_att1.shape[0]
    C_out = w_fc.shape[0]
    out_dtype = x.dtype
    mxu_dtype = jnp.bfloat16

    # Pad S to a sublane multiple so in-kernel reshapes are layout no-ops;
    # padded instances are masked out of the softmax inside the kernel.
    S_pad = ((S + 7) // 8) * 8
    tb, B_pad = _tile_plan(B, S_pad, target_rows)

    # One-time glue: cast MXU operands to bf16 and pre-transpose weights to
    # (in, out) so the kernel runs plain x @ w. Biases stay f32.
    xb = x.astype(mxu_dtype)
    if S_pad != S or B_pad != B:
        xb = jnp.pad(xb, ((0, B_pad - B), (0, S_pad - S), (0, 0)))
    wr_t = w_reduce.T.astype(mxu_dtype)            # (C_in, C_r)
    wa1_t = w_att1.T.astype(mxu_dtype)             # (C_r, H)
    wa2_r = w_att2.reshape(1, H).astype(mxu_dtype)  # (1, H)
    wfc_t = w_fc.T.astype(mxu_dtype)               # (C_r, C_out)
    br2 = b_reduce.reshape(1, C_r).astype(jnp.float32)
    ba1_2 = b_att1.reshape(1, H).astype(jnp.float32)
    ba2_2 = b_att2.reshape(1, 1).astype(jnp.float32)
    bfc_2 = b_fc.reshape(1, C_out).astype(jnp.float32)

    grid = (B_pad // tb,)
    rows = tb * S_pad

    # VMEM budget from actual block sizes: streamed x slab (double-buffered),
    # resident weights (single-buffered), f32 intermediates (z, h), output.
    est = (2 * rows * C_in * 2
           + (C_in * C_r + C_r * H + H + C_r * C_out) * 2
           + (C_r + H + 1 + C_out) * 4
           + rows * C_r * 4 + rows * H * 4
           + 2 * tb * C_out * 4)
    vmem_limit = int(min(max(2 * est, 16 << 20), 64 << 20))

    cost = pl.CostEstimate(
        flops=2 * B * S * (C_in * C_r + C_r * H + H)
              + 2 * B * S * C_r + 2 * B * C_r * C_out,
        transcendentals=B * S * (H + 1),                 # tanh + exp
        bytes_accessed=(B_pad * S_pad * C_in
                        + C_in * C_r + C_r * H + H + C_r * C_out) * 2
                       + (C_r + H + 1 + C_out) * 4
                       + B_pad * C_out * jnp.dtype(out_dtype).itemsize,
    )

    const2 = lambda b: (0, 0)
    resident = dict(pipeline_mode=pl.Buffered(1))        # weights DMA'd once

    out = pl.pallas_call(
        functools.partial(_reduce_attention_kernel, s_valid=S),
        out_shape=jax.ShapeDtypeStruct((B_pad, C_out), out_dtype),
        grid_spec=pltpu.PrefetchScalarGridSpec(
            num_scalar_prefetch=0,
            grid=grid,
            in_specs=[
                pl.BlockSpec((tb, S_pad, C_in), lambda b: (b, 0, 0)),
                pl.BlockSpec((C_in, C_r), const2, **resident),
                pl.BlockSpec((1, C_r), const2, **resident),
                pl.BlockSpec((C_r, H), const2, **resident),
                pl.BlockSpec((1, H), const2, **resident),
                pl.BlockSpec((1, H), const2, **resident),
                pl.BlockSpec((1, 1), const2, **resident),
                pl.BlockSpec((C_r, C_out), const2, **resident),
                pl.BlockSpec((1, C_out), const2, **resident),
            ],
            out_specs=pl.BlockSpec((tb, C_out), lambda b: (b, 0)),
        ),
        compiler_params=pltpu.CompilerParams(
            dimension_semantics=("parallel",),
            vmem_limit_bytes=vmem_limit),
        cost_estimate=cost,
    )(xb, wr_t, br2, wa1_t, ba1_2, wa2_r, ba2_2, wfc_t, bfc_2)

    return out[:B] if B_pad != B else out


if __name__ == "__main__":
    key = jax.random.PRNGKey(0)
    keys = jax.random.split(key, 9)

    # Small stand-ins for (in_channels, reduce_channels=512, hidden=2048, out_channels).
    B, S = 2, 8
    C_in, C_r, H, C_out = 32, 16, 32, 8

    x = jax.random.normal(keys[0], (B, S, C_in), dtype=jnp.float32)

    def linear_params(kw, kb, out_f, in_f):
        bound = 1.0 / (in_f ** 0.5)
        w = jax.random.uniform(kw, (out_f, in_f), jnp.float32, -bound, bound)
        b = jax.random.uniform(kb, (out_f,), jnp.float32, -bound, bound)
        return w, b

    w_reduce, b_reduce = linear_params(keys[1], keys[2], C_r, C_in)
    w_att1, b_att1 = linear_params(keys[3], keys[4], H, C_r)
    w_att2, b_att2 = linear_params(keys[5], keys[6], 1, H)
    w_fc, b_fc = linear_params(keys[7], keys[8], C_out, C_r)

    out = jax.block_until_ready(
        reduce_attention(x, w_reduce, b_reduce, w_att1, b_att1,
                         w_att2, b_att2, w_fc, b_fc))

    # Pure-JAX reference (mirrors the PyTorch forward). Inputs are rounded to
    # bf16 to match what the kernel feeds the MXU; remaining differences come
    # from intermediate bf16 casts and the approx reciprocal, hence the
    # relaxed tolerance.
    f32 = jnp.float32
    xr = x.astype(jnp.bfloat16).astype(f32)
    wrr = w_reduce.astype(jnp.bfloat16).astype(f32)
    wa1r = w_att1.astype(jnp.bfloat16).astype(f32)
    wa2r = w_att2.astype(jnp.bfloat16).astype(f32)
    wfcr = w_fc.astype(jnp.bfloat16).astype(f32)

    z = jnp.einsum("bsc,rc->bsr", xr, wrr) + b_reduce
    h = jnp.tanh(jnp.einsum("bsr,hr->bsh", z, wa1r) + b_att1)
    logits = jnp.einsum("bsh,oh->bso", h, wa2r) + b_att2
    a = jax.nn.softmax(logits, axis=1)
    feat = jnp.sum(z * a, axis=1)
    ref = jnp.einsum("br,or->bo", feat, wfcr) + b_fc

    assert out.shape == (B, C_out)
    assert jnp.allclose(out, ref, atol=3e-2, rtol=3e-2), \
        float(jnp.max(jnp.abs(out - ref)))

    print("KERNEL_OK")
</pallas_src>

<mosaic_0001>
module attributes {stable_mosaic.version = 11 : i64} {
  func.func @_reduce_attention_kernel(%arg0: i32, %arg1: memref<2x8x32xbf16, #tpu.memory_space<vmem>>, %arg2: memref<32x16xbf16, #tpu.memory_space<vmem>>, %arg3: memref<1x16xf32, #tpu.memory_space<vmem>>, %arg4: memref<16x32xbf16, #tpu.memory_space<vmem>>, %arg5: memref<1x32xf32, #tpu.memory_space<vmem>>, %arg6: memref<1x32xbf16, #tpu.memory_space<vmem>>, %arg7: memref<1x1xf32, #tpu.memory_space<vmem>>, %arg8: memref<16x8xbf16, #tpu.memory_space<vmem>>, %arg9: memref<1x8xf32, #tpu.memory_space<vmem>>, %arg10: memref<2x8xf32, #tpu.memory_space<vmem>>) attributes {dimension_semantics = [#tpu.dimension_semantics<parallel>], iteration_bounds = array<i64: 1>, scalar_prefetch = 0 : i64, scratch_operands = 0 : i64, tpu.core_type = #tpu.core_type<tc>, window_params = [{transform_indices = @transform_0, window_bounds = array<i64: 2, 8, 32>}, {pipeline_mode = #tpu.pipeline_mode<synchronous>, transform_indices = @transform_1, window_bounds = array<i64: 32, 16>}, {pipeline_mode = #tpu.pipeline_mode<synchronous>, transform_indices = @transform_2, window_bounds = array<i64: 1, 16>}, {pipeline_mode = #tpu.pipeline_mode<synchronous>, transform_indices = @transform_3, window_bounds = array<i64: 16, 32>}, {pipeline_mode = #tpu.pipeline_mode<synchronous>, transform_indices = @transform_4, window_bounds = array<i64: 1, 32>}, {pipeline_mode = #tpu.pipeline_mode<synchronous>, transform_indices = @transform_5, window_bounds = array<i64: 1, 32>}, {pipeline_mode = #tpu.pipeline_mode<synchronous>, transform_indices = @transform_6, window_bounds = array<i64: 1, 1>}, {pipeline_mode = #tpu.pipeline_mode<synchronous>, transform_indices = @transform_7, window_bounds = array<i64: 16, 8>}, {pipeline_mode = #tpu.pipeline_mode<synchronous>, transform_indices = @transform_8, window_bounds = array<i64: 1, 8>}, {transform_indices = @transform_9, window_bounds = array<i64: 2, 8>}]} {
    %c0 = arith.constant 0 : index
    %c0_0 = arith.constant 0 : index
    %c0_1 = arith.constant 0 : index
    %0 = vector.load %arg1[%c0, %c0_0, %c0_1] : memref<2x8x32xbf16, #tpu.memory_space<vmem>>, vector<2x8x32xbf16>
    %1 = vector.shape_cast %0 : vector<2x8x32xbf16> to vector<16x32xbf16>
    %c0_2 = arith.constant 0 : index
    %c0_3 = arith.constant 0 : index
    %2 = vector.load %arg2[%c0_2, %c0_3] : memref<32x16xbf16, #tpu.memory_space<vmem>>, vector<32x16xbf16>
    %cst = arith.constant dense<0.000000e+00> : vector<16x16xf32>
    %3 = tpu.matmul %1, %2, %cst {dimension_numbers = #tpu.dot_dimension_numbers<[1], [0], [0], [1], [0, 0, 1, 1], [], []>} : vector<16x32xbf16>, vector<32x16xbf16>, vector<16x16xf32> -> vector<16x16xf32>
    %c0_4 = arith.constant 0 : index
    %c0_5 = arith.constant 0 : index
    %4 = vector.load %arg3[%c0_4, %c0_5] : memref<1x16xf32, #tpu.memory_space<vmem>>, vector<1x16xf32>
    %5 = vector.broadcast %4 : vector<1x16xf32> to vector<16x16xf32>
    %6 = arith.addf %3, %5 : vector<16x16xf32>
    %7 = arith.truncf %6 : vector<16x16xf32> to vector<16x16xbf16>
    %c0_6 = arith.constant 0 : index
    %c0_7 = arith.constant 0 : index
    %8 = vector.load %arg4[%c0_6, %c0_7] : memref<16x32xbf16, #tpu.memory_space<vmem>>, vector<16x32xbf16>
    %cst_8 = arith.constant dense<0.000000e+00> : vector<16x32xf32>
    %9 = tpu.matmul %7, %8, %cst_8 {dimension_numbers = #tpu.dot_dimension_numbers<[1], [0], [0], [1], [0, 0, 1, 1], [], []>} : vector<16x16xbf16>, vector<16x32xbf16>, vector<16x32xf32> -> vector<16x32xf32>
    %c0_9 = arith.constant 0 : index
    %c0_10 = arith.constant 0 : index
    %10 = vector.load %arg5[%c0_9, %c0_10] : memref<1x32xf32, #tpu.memory_space<vmem>>, vector<1x32xf32>
    %11 = vector.broadcast %10 : vector<1x32xf32> to vector<16x32xf32>
    %12 = arith.addf %9, %11 : vector<16x32xf32>
    %13 = math.tanh %12 : vector<16x32xf32>
    %14 = vector.shape_cast %13 : vector<16x32xf32> to vector<2x8x32xf32>
    %c0_11 = arith.constant 0 : index
    %c0_12 = arith.constant 0 : index
    %15 = vector.load %arg6[%c0_11, %c0_12] : memref<1x32xbf16, #tpu.memory_space<vmem>>, vector<1x32xbf16>
    %16 = arith.extf %15 : vector<1x32xbf16> to vector<1x32xf32>
    %17 = vector.shape_cast %16 : vector<1x32xf32> to vector<1x1x32xf32>
    %18 = vector.broadcast %17 : vector<1x1x32xf32> to vector<2x8x32xf32>
    %19 = arith.mulf %14, %18 : vector<2x8x32xf32>
    %cst_13 = arith.constant dense<0.000000e+00> : vector<2x8xf32>
    %20 = vector.multi_reduction <add>, %19, %cst_13 [2] : vector<2x8x32xf32> to vector<2x8xf32>
    %c0_14 = arith.constant 0 : index
    %c0_15 = arith.constant 0 : index
    %21 = vector.load %arg7[%c0_14, %c0_15] : memref<1x1xf32, #tpu.memory_space<vmem>>, vector<1x1xf32>
    %22 = vector.broadcast %21 : vector<1x1xf32> to vector<2x8xf32>
    %23 = arith.addf %20, %22 : vector<2x8xf32>
    %cst_16 = arith.constant dense<0xFF800000> : vector<2xf32>
    %24 = vector.multi_reduction <maximumf>, %23, %cst_16 [1] : vector<2x8xf32> to vector<2xf32>
    %25 = vector.shape_cast %24 : vector<2xf32> to vector<2x1xf32>
    %26 = vector.broadcast %25 : vector<2x1xf32> to vector<2x8xf32>
    %27 = arith.subf %23, %26 : vector<2x8xf32>
    %28 = math.exp %27 : vector<2x8xf32>
    %cst_17 = arith.constant dense<0.000000e+00> : vector<2xf32>
    %29 = vector.multi_reduction <add>, %28, %cst_17 [1] : vector<2x8xf32> to vector<2xf32>
    %30 = vector.shape_cast %29 : vector<2xf32> to vector<2x1xf32>
    %31 = tpu.reciprocal %30 {approx = true} : vector<2x1xf32> -> vector<2x1xf32>
    %32 = vector.broadcast %31 : vector<2x1xf32> to vector<2x8xf32>
    %33 = arith.mulf %28, %32 : vector<2x8xf32>
    %34 = vector.shape_cast %6 : vector<16x16xf32> to vector<2x8x16xf32>
    %35 = vector.shape_cast %33 : vector<2x8xf32> to vector<2x8x1xf32>
    %36 = vector.broadcast %35 : vector<2x8x1xf32> to vector<2x8x16xf32>
    %37 = arith.mulf %34, %36 : vector<2x8x16xf32>
    %cst_18 = arith.constant dense<0.000000e+00> : vector<2x16xf32>
    %38 = vector.multi_reduction <add>, %37, %cst_18 [1] : vector<2x8x16xf32> to vector<2x16xf32>
    %39 = arith.truncf %38 : vector<2x16xf32> to vector<2x16xbf16>
    %c0_19 = arith.constant 0 : index
    %c0_20 = arith.constant 0 : index
    %40 = vector.load %arg8[%c0_19, %c0_20] : memref<16x8xbf16, #tpu.memory_space<vmem>>, vector<16x8xbf16>
    %cst_21 = arith.constant dense<0.000000e+00> : vector<2x8xf32>
    %41 = tpu.matmul %39, %40, %cst_21 {dimension_numbers = #tpu.dot_dimension_numbers<[1], [0], [0], [1], [0, 0, 1, 1], [], []>} : vector<2x16xbf16>, vector<16x8xbf16>, vector<2x8xf32> -> vector<2x8xf32>
    %c0_22 = arith.constant 0 : index
    %c0_23 = arith.constant 0 : index
    %42 = vector.load %arg9[%c0_22, %c0_23] : memref<1x8xf32, #tpu.memory_space<vmem>>, vector<1x8xf32>
    %43 = vector.broadcast %42 : vector<1x8xf32> to vector<2x8xf32>
    %44 = arith.addf %41, %43 : vector<2x8xf32>
    %c0_24 = arith.constant 0 : index
    %c0_25 = arith.constant 0 : index
    %45 = vector.load %arg10[%c0_24, %c0_25] : memref<2x8xf32, #tpu.memory_space<vmem>>, vector<2x8xf32>
    tpu.vector_store %arg10[%c0_24, %c0_25], %44 {strides = array<i32>} : memref<2x8xf32, #tpu.memory_space<vmem>>, vector<2x8xf32>,
    return
  }
  func.func @transform_0(%arg0: i32) -> (i32, i32, i32) {
    %c0_i32 = arith.constant 0 : i32
    %c0_i32_0 = arith.constant 0 : i32
    %c0_i32_1 = arith.constant 0 : i32
    return %arg0, %c0_i32, %c0_i32_0 : i32, i32, i32
  }
  func.func @transform_1(%arg0: i32) -> (i32, i32) {
    %c0_i32 = arith.constant 0 : i32
    %c0_i32_0 = arith.constant 0 : i32
    %c0_i32_1 = arith.constant 0 : i32
    return %c0_i32, %c0_i32_0 : i32, i32
  }
  func.func @transform_2(%arg0: i32) -> (i32, i32) {
    %c0_i32 = arith.constant 0 : i32
    %c0_i32_0 = arith.constant 0 : i32
    %c0_i32_1 = arith.constant 0 : i32
    return %c0_i32, %c0_i32_0 : i32, i32
  }
  func.func @transform_3(%arg0: i32) -> (i32, i32) {
    %c0_i32 = arith.constant 0 : i32
    %c0_i32_0 = arith.constant 0 : i32
    %c0_i32_1 = arith.constant 0 : i32
    return %c0_i32, %c0_i32_0 : i32, i32
  }
  func.func @transform_4(%arg0: i32) -> (i32, i32) {
    %c0_i32 = arith.constant 0 : i32
    %c0_i32_0 = arith.constant 0 : i32
    %c0_i32_1 = arith.constant 0 : i32
    return %c0_i32, %c0_i32_0 : i32, i32
  }
  func.func @transform_5(%arg0: i32) -> (i32, i32) {
    %c0_i32 = arith.constant 0 : i32
    %c0_i32_0 = arith.constant 0 : i32
    %c0_i32_1 = arith.constant 0 : i32
    return %c0_i32, %c0_i32_0 : i32, i32
  }
  func.func @transform_6(%arg0: i32) -> (i32, i32) {
    %c0_i32 = arith.constant 0 : i32
    %c0_i32_0 = arith.constant 0 : i32
    %c0_i32_1 = arith.constant 0 : i32
    return %c0_i32, %c0_i32_0 : i32, i32
  }
  func.func @transform_7(%arg0: i32) -> (i32, i32) {
    %c0_i32 = arith.constant 0 : i32
    %c0_i32_0 = arith.constant 0 : i32
    %c0_i32_1 = arith.constant 0 : i32
    return %c0_i32, %c0_i32_0 : i32, i32
  }
  func.func @transform_8(%arg0: i32) -> (i32, i32) {
    %c0_i32 = arith.constant 0 : i32
    %c0_i32_0 = arith.constant 0 : i32
    %c0_i32_1 = arith.constant 0 : i32
    return %c0_i32, %c0_i32_0 : i32, i32
  }
  func.func @transform_9(%arg0: i32) -> (i32, i32) {
    %c0_i32 = arith.constant 0 : i32
    %c0_i32_0 = arith.constant 0 : i32
    return %arg0, %c0_i32 : i32, i32
  }
}

</mosaic_0001>

<llo_original>
// kernel: tpu_custom_call.1
$region0: #{tpu_custom_call.1}
  #allocation0 [shape = 'u32[]', space=smem, size = 0x4, offset = 0x4, fixed_abs, tag = 'smem constant byte address 0x4 - core index']
  #allocation1 [shape = 'u32[72,128]{1,0:T(1,128)}', space=vmem, size = 0x9000, scoped, tag = 'internal scratch']
  #allocation2 [shape = 'f32[1,1]{1,0:T(1,128)S(1)}', space=vmem, size = 0x200, scoped, tag = 'scoped memory for tpu_custom_call.1']
  %s0 = inlined_call_operand.vmem [shape: bf16[2,8,32], index: 0, kind: input, shape index: {}]
  %s1 = inlined_call_operand.vmem [shape: bf16[32,16], index: 1, kind: input, shape index: {}]
  %s2 = inlined_call_operand.vmem [shape: f32[1,16], index: 2, kind: input, shape index: {}]
  %s3 = inlined_call_operand.vmem [shape: bf16[16,32], index: 3, kind: input, shape index: {}]
  %s4 = inlined_call_operand.vmem [shape: f32[1,32], index: 4, kind: input, shape index: {}]
  %s5 = inlined_call_operand.vmem [shape: bf16[1,32], index: 5, kind: input, shape index: {}]
  %s6 = inlined_call_operand.<no memory space> [shape: f32[1,1], index: 6, kind: input, shape index: {}]
  %s7 = inlined_call_operand.vmem [shape: bf16[16,8], index: 7, kind: input, shape index: {}]
  %s8 = inlined_call_operand.vmem [shape: f32[1,8], index: 8, kind: input, shape index: {}]
  %s9 = inlined_call_operand.hbm [shape: f32[2,8], index: 9, kind: output, shape index: {}]
  %s10 = sld [smem:[#allocation0]]
  $region46: #{tpu_custom_call.1} parent=0
    _
  %s12 = ssub.s32 1, %s10
  %s13 = scalar_select 0, %s12, %s10
  %v14 = vstv %s6
  %15 = vst [vmem:[#allocation2] sm:$0x1] %v14
  $region1: #{tpu_custom_call.1} parent=0
    #allocation3 [shape = 'u8[1024]{0}', space=vmem, size = 0x400, scoped, tag = 'output window, operand 0, single buffered']
    #allocation4 [shape = 's32[1]{0}', space=sflag, size = 0x4, scoped, tag = 'scoped memory for tpu_custom_call.1']
    %16 = vsyncpa [#allocation4], 0
    // Predicated region
    $region2: #{tpu_custom_call.1} parent=1 // pred_check
      _
    $region3: #{tpu_custom_call.1} parent=1 // pred_check_branch
      %18 = sbr.rel (0) target = $region5
    $region4: #{tpu_custom_call.1} parent=1 // pred_region
      _
    $region5: #{tpu_custom_call.1} parent=1 // pred_fallthru
      _
    // Predicated region
    $region6: #{tpu_custom_call.1} parent=1 // pred_check
      _
    $region7: #{tpu_custom_call.1} parent=1 // pred_check_branch
      %20 = sbr.rel (0) target = $region9
    $region8: #{tpu_custom_call.1} parent=1 // pred_region
      _
    $region9: #{tpu_custom_call.1} parent=1 // pred_fallthru
      _
    // Predicated region
    $region10: #{tpu_custom_call.1} parent=1 // pred_check
      _
    $region11: #{tpu_custom_call.1} parent=1 // pred_check_branch
      %22 = sbr.rel (0) target = $region13
    $region12: #{tpu_custom_call.1} parent=1 // pred_region
      _
    $region13: #{tpu_custom_call.1} parent=1 // pred_fallthru
      _
    // Predicated region
    $region14: #{tpu_custom_call.1} parent=1 // pred_check
      _
    $region15: #{tpu_custom_call.1} parent=1 // pred_check_branch
      %24 = sbr.rel (0) target = $region17
    $region16: #{tpu_custom_call.1} parent=1 // pred_region
      _
    $region17: #{tpu_custom_call.1} parent=1 // pred_fallthru
      _
    // Predicated region
    $region18: #{tpu_custom_call.1} parent=1 // pred_check
      _
    $region19: #{tpu_custom_call.1} parent=1 // pred_check_branch
      %26 = sbr.rel (0) target = $region21
    $region20: #{tpu_custom_call.1} parent=1 // pred_region
      _
    $region21: #{tpu_custom_call.1} parent=1 // pred_fallthru
      _
    // Predicated region
    $region22: #{tpu_custom_call.1} parent=1 // pred_check
      _
    $region23: #{tpu_custom_call.1} parent=1 // pred_check_branch
      %28 = sbr.rel (0) target = $region25
    $region24: #{tpu_custom_call.1} parent=1 // pred_region
      _
    $region25: #{tpu_custom_call.1} parent=1 // pred_fallthru
      _
    // Predicated region
    $region26: #{tpu_custom_call.1} parent=1 // pred_check
      _
    $region27: #{tpu_custom_call.1} parent=1 // pred_check_branch
      %30 = sbr.rel (0) target = $region29
    $region28: #{tpu_custom_call.1} parent=1 // pred_region
      _
    $region29: #{tpu_custom_call.1} parent=1 // pred_fallthru
      _
    // Predicated region
    $region30: #{tpu_custom_call.1} parent=1 // pred_check
      _
    $region31: #{tpu_custom_call.1} parent=1 // pred_check_branch
      %32 = sbr.rel (0) target = $region33
    $region32: #{tpu_custom_call.1} parent=1 // pred_region
      _
    $region33: #{tpu_custom_call.1} parent=1 // pred_fallthru
      _
    // Predicated region
    $region34: #{tpu_custom_call.1} parent=1 // pred_check
      _
    $region35: #{tpu_custom_call.1} parent=1 // pred_check_branch
      %34 = sbr.rel (0) target = $region37
    $region36: #{tpu_custom_call.1} parent=1 // pred_region
      _
    $region37: #{tpu_custom_call.1} parent=1 // pred_fallthru
      _
    %v36 = vld [vmem:[%s0] sm:$0xf]
    %v37 = vld [vmem:[%s0 + $0x4] sm:$0xf]
    %v38 = vld [vmem:[%s1] sm:$0xf]
    %v39 = vld [vmem:[%s1 + $0x4] sm:$0xf]
    %v40 = vld [vmem:[%s1 + $0x8] sm:$0xf]
    %v41 = vld [vmem:[%s1 + $0xc] sm:$0xf]
    %v42 = vld [vmem:[%s2] sm:$0x1]
    %v44 = vperm.slane %v42, 0
    %v48 = vunpack.c.l.b16 %v36
    %v49 = vunpack.c.l.b16 %v37
    %v50 = vpack.c.b16 %v49, %v48
    %v55 = vunpack.c.l.b16 %v38
    %v56 = vunpack.c.l.b16 %v39
    %v57 = vunpack.c.l.b16 %v40
    %v58 = vunpack.c.l.b16 %v41
    %v59 = vpack.c.b16 %v56, %v55
    %v60 = vpack.c.b16 %v58, %v57
    %vm63 = vcmask 261120
    %v65 = vsel %vm63, %v50, 0
    %67 = vmatpush.bf16.msra.mxu0 0
    %68 = vmatpush.bf16.msra.mxu0 0
    %69 = vmatpush.bf16.msra.mxu0 0
    %70 = vmatpush.bf16.msra.mxu0 0
    %71 = vmatpush.bf16.msra.mxu0 0
    %72 = vmatpush.bf16.msra.mxu0 0
    %73 = vmatpush.bf16.msra.mxu0 %v60
    %74 = vmatpush.bf16.msra.mxu0 %v59
    %75 = vmatmul.bf16.gmra.mxu0 %v65
    %v76 = vpop.f32.mrf.mxu0
    %v77 = vadd.f32 %v44, %v76
    %v78 = vpop.f32.mrf.mxu0
    %v79 = vadd.f32 %v44, %v78
    %80 = vdwg.mxu0
    %v81 = vpack.c.bf16 %v79, %v77
    %v82 = vld [vmem:[%s3] sm:$0xf]
    %v83 = vld [vmem:[%s3 + $0x4] sm:$0xf]
    %v84 = vld [vmem:[%s4] sm:$0x1]
    %v86 = vperm.slane %v84, 0
    %v90 = vunpack.c.l.b16 %v82
    %v91 = vunpack.c.l.b16 %v83
    %v92 = vpack.c.b16 %v91, %v90
    %vm94 = vcmask 130048
    %v96 = vsel %vm94, %v81, 0
    %98 = vmatpush.bf16.msra.mxu0 0
    %99 = vmatpush.bf16.msra.mxu0 0
    %100 = vmatpush.bf16.msra.mxu0 0
    %101 = vmatpush.bf16.msra.mxu0 0
    %102 = vmatpush.bf16.msra.mxu0 0
    %103 = vmatpush.bf16.msra.mxu0 0
    %104 = vmatpush.bf16.msra.mxu0 0
    %105 = vmatpush.bf16.msra.mxu0 %v92
    %106 = vmatmul.bf16.gmra.mxu0 %v96
    %v107 = vpop.f32.mrf.mxu0
    %v108 = vadd.f32 %v86, %v107
    %v109 = vpop.f32.mrf.mxu0
    %v110 = vadd.f32 %v86, %v109
    %111 = vdwg.mxu0
    %v112 = vtanh.pop %v108
    %v113 = vtanh.pop %v110
    %v114 = vld [vmem:[%s5] sm:$0x1]
    %v115 = vunpack.c.l.bf16 %v114
    %v116 = vperm.slane %v115, 0
    %v117 = vmul.f32 %v112, %v116
    %v118 = vmul.f32 %v113, %v116
    %v119 = vsel %vm63, %v117, 0.0
    %120 = vadd.xlane.f32.xlu0 %v119
    %v121 = vpop.xlane.xlu0 %120
    %v122 = vsel %vm63, %v118, 0.0
    %123 = vadd.xlane.f32.xlu0 %v122
    %v124 = vpop.xlane.xlu0 %123
    %v125 = vld [vmem:[#allocation2] sm:$0x1]
    %v127 = vperm.slane %v125, 0
    %128 = vset.pattern.permute.xlu0 0
    %129 = vperm.xlu0 %128, %v127
    %v130 = vpop.permute.xlu0 %129
    %v132 = vadd.f32 %v121, %v130
    %v133 = vadd.f32 %v124, %v130
    %v136 = vlaneseq
    %v137 = vand.u32 %v136, 127
    %v138 = vperm.slane %v132, %v137
    %v139 = vperm.slane %v133, %v137
    %vm140 = vcmask 1041409
    %v141 = vsel %vm140, %v139, %v138
    %vm143 = vcmask 58368
    %v144 = vsel %vm143, %v141, -inf
    %145 = vmax.xlane.f32.xlu0 %v144
    %v146 = vpop.xlane.xlu0 %145
    %v148 = vperm.slane %v146, 0
    %v149 = vperm.slane %v146, 1
    %v152 = vsub.f32 %v132, %v148
    %v153 = vsub.f32 %v133, %v149
    %v154 = vmul.f32 %v152, 1.442695
    %v155 = vpow.pop %v154
    %v156 = vmul.f32 %v153, 1.442695
    %v157 = vpow.pop %v156
    %160 = vset.pattern.permute.xlu0 0
    %161 = vperm.xlu0 %160, %v155
    %v162 = vpop.permute.xlu0 %161
    %163 = vset.pattern.permute.xlu0 0
    %164 = vperm.xlu0 %163, %v157
    %v165 = vpop.permute.xlu0 %164
    %v166 = vperm.slane %v162, %v137
    %v167 = vperm.slane %v165, %v137
    %v168 = vsel %vm140, %v167, %v166
    %v170 = vsel %vm143, %v168, 0.0
    %171 = vadd.xlane.f32.xlu0 %v170
    %v172 = vpop.xlane.xlu0 %171
    %v173 = vrcp.pop %v172
    %v175 = vperm.slane %v173, 0
    %v176 = vperm.slane %v173, 1
    %v179 = vmul.f32 %v155, %v175
    %v180 = vmul.f32 %v157, %v176
    %182 = vset.pattern.permute.xlu0 0
    %183 = vperm.xlu0 %182, %v179
    %v184 = vpop.permute.xlu0 %183
    %187 = vset.pattern.permute.xlu0 0
    %188 = vperm.xlu0 %187, %v180
    %v189 = vpop.permute.xlu0 %188
    %v191 = vmul.f32 %v77, %v184
    %v192 = vmul.f32 %v79, %v189
    %v193 = vsel %vm94, %v191, 0.0
    %v194 = vrot.slane %v193, 4
    %v195 = vadd.f32 %v193, %v194
    %v196 = vrot.slane %v195, 2
    %v197 = vadd.f32 %v195, %v196
    %v198 = vrot.slane %v197, 1
    %v199 = vadd.f32 %v197, %v198
    %v200 = vsel %vm94, %v192, 0.0
    %v201 = vrot.slane %v200, 4
    %v202 = vadd.f32 %v200, %v201
    %v203 = vrot.slane %v202, 2
    %v204 = vadd.f32 %v202, %v203
    %v205 = vrot.slane %v204, 1
    %v206 = vadd.f32 %v204, %v205
    %v207 = vpack.c.bf16 %v199, %v199
    %v208 = vpack.c.bf16 %v206, %v206
    %v209 = vld [vmem:[%s7] sm:$0xf]
    %v210 = vld [vmem:[%s7 + $0x4] sm:$0xf]
    %v211 = vld [vmem:[%s8] sm:$0x1]
    %v213 = vperm.slane %v211, 0
    %v217 = vunpack.c.l.b16 %v207
    %v218 = vunpack.c.l.b16 %v208
    %v219 = vsel %vm140, %v218, %v217
    %v220 = vpack.c.b16 %v219, %v219
    %v223 = vunpack.c.l.b16 %v209
    %v224 = vunpack.c.l.b16 %v210
    %v225 = vpack.c.b16 %v224, %v223
    %v228 = vsel %vm94, %v220, 0
    %230 = vmatpush.bf16.msra.mxu0 0
    %231 = vmatpush.bf16.msra.mxu0 0
    %232 = vmatpush.bf16.msra.mxu0 0
    %233 = vmatpush.bf16.msra.mxu0 0
    %234 = vmatpush.bf16.msra.mxu0 0
    %235 = vmatpush.bf16.msra.mxu0 0
    %236 = vmatpush.bf16.msra.mxu0 0
    %237 = vmatpush.bf16.msra.mxu0 %v225
    %238 = vmatmul.bf16.gmra.mxu0 %v228
    %v239 = vpop.f32.mrf.mxu0
    %v240 = vadd.f32 %v213, %v239
    %v241 = vpop.f32.mrf.mxu0
    %242 = vdwg.mxu0
    %243 = vst.msk [vmem:[#allocation3] sm:$0x3] %vm143, %v240
    // Predicated region
    $region38: #{tpu_custom_call.1} parent=1 // pred_check
      _
    $region39: #{tpu_custom_call.1} parent=1 // pred_check_branch
      %245 = sbr.rel (0) target = $region41
    $region40: #{tpu_custom_call.1} parent=1 // pred_region
      %247 = vsyncadd [#allocation4], 0
      %s249 = sshll.u32 [#allocation3], 4
      %s250 = int_to_ptr.vmem [resolvable:$true] %s249
      %s251 = sshll.u32 %s9, 4
      %s252 = int_to_ptr.hbm [resolvable:$true] %s251
      %254 = dma.vmem_to_hbm [thread:$0]  %s250, 32, %s252, [#allocation4]
    $region41: #{tpu_custom_call.1} parent=1 // pred_fallthru
      _
    // Predicated region
    $region42: #{tpu_custom_call.1} parent=1 // pred_check
      _
    $region43: #{tpu_custom_call.1} parent=1 // pred_check_branch
      %256 = sbr.rel (0) target = $region45
    $region44: #{tpu_custom_call.1} parent=1 // pred_region
      %258 = dma.done [#allocation4], 32
    $region45: #{tpu_custom_call.1} parent=1 // pred_fallthru
      _
    %259 = vsyncpa [#allocation4], 1

</llo_original>
